<compile_context>
chip_gen: v7x
topology: tpu7x:2x2x1
jax: 0.10.0
libtpu: 0.0.40
codegen_flags: <defaults>
</compile_context>

<pallas_src>
import functools
import math

import jax
import jax.numpy as jnp
from jax import lax
from jax.experimental import pallas as pl
from jax.experimental.pallas import tpu as pltpu

LANES = 128
SUBLANES = 8
TARGET_BLOCK_BYTES = 2 * 1024 * 1024  # per pipeline buffer per input


def _cdiv(a, b):
    return -(-a // b)


def _round_up(v, m):
    return _cdiv(v, m) * m


def _int_pow(v, n):
    """v**n for small positive integer n via repeated multiply (no EUP)."""
    r = v
    for _ in range(n - 1):
        r = r * v
    return r


def _make_focal_kernel(gamma, eps, n_rows, row_tile, steps, nblocks):
    gamma = float(gamma)
    g_int = int(gamma) if (gamma.is_integer() and 0.0 <= gamma <= 8.0) else None
    log_eps = float(math.log(eps))

    def kernel(x_ref, t_ref, out_ref):
        c = pl.program_id(0)   # parallel shard (TensorCore on v7x)
        i = pl.program_id(1)   # streaming / reduction axis

        @pl.when(i == 0)
        def _():
            out_ref[...] = jnp.zeros_like(out_ref)

        x = x_ref[...].astype(jnp.float32)
        t = t_ref[...].astype(jnp.float32)

        # sigmoid via a single EUP tanh; log(1-p) via log(p) - x, clipped to the
        # [log(eps), 0] range of the reference's eps-clamped log (identity is
        # exact for |x| <~ 18 and more stable beyond).
        p = 0.5 * jnp.tanh(0.5 * x) + 0.5
        lp = jnp.log(p + eps)                     # log(p + eps)
        lomp = jnp.clip(lp - x, log_eps, 0.0)     # ~= log(1 - p + eps)

        if g_int == 0:
            loss = -(t * lp) - ((1.0 - t) * lomp)
        elif g_int is not None:
            w_pos = _int_pow(1.0 - p, g_int)      # (1-p)^gamma, VPU only
            w_neg = _int_pow(p, g_int)            # p^gamma
            loss = -(w_pos * t * lp) - (w_neg * (1.0 - t) * lomp)
        else:
            # non-integer gamma: reuse the logs already on hand (2 extra exps)
            w_pos = jnp.exp(gamma * lomp)
            w_neg = jnp.exp(gamma * lp)
            loss = -(w_pos * t * lp) - (w_neg * (1.0 - t) * lomp)

        wl = loss.shape[1]
        logical_blk = c * steps + i
        blk = jnp.minimum(logical_blk, nblocks - 1)  # what the index_map fetched
        is_valid = logical_blk < nblocks             # clamped duplicates are skipped
        thr = n_rows - blk * row_tile                # valid rows in this block

        @pl.when(jnp.logical_and(is_valid, thr >= row_tile))
        def _():  # full block: per-lane partial sum straight into the output block
            out_ref[0:1, 0:wl] = (out_ref[0:1, 0:wl]
                                  + jnp.sum(loss, axis=0, keepdims=True))

        @pl.when(jnp.logical_and(is_valid, thr < row_tile))
        def _():  # trailing partial block: mask padded rows (block-local threshold)
            rid = lax.broadcasted_iota(jnp.int32, loss.shape, 0)
            masked = jnp.where(rid < thr, loss, 0.0)
            out_ref[0:1, 0:wl] = (out_ref[0:1, 0:wl]
                                  + jnp.sum(masked, axis=0, keepdims=True))

    return kernel


def _focal_loss_sum(x, t, gamma, eps):
    """Sum of the element-wise focal loss over every element of x / t."""
    assert x.shape == t.shape, "input/target shape mismatch"
    n = x.size
    if x.dtype != jnp.float32:
        x = x.astype(jnp.float32)   # TODO(synk): bf16 inputs pay a cast copy here
    if t.dtype != jnp.float32:
        t = t.astype(jnp.float32)

    # Lane-dense view without padding copies.
    if n % LANES == 0:
        wl = LANES                            # (n/128, 128): fully lane-dense
    else:
        wl = x.shape[-1] if x.ndim > 1 else n  # (rows, W): exact HBM traffic
    n_rows = n // wl
    lpad = _round_up(wl, LANES)

    if lpad * SUBLANES * 4 > 4 * 1024 * 1024:
        # TODO(synk): unaligned totals with a huge last dim would need lane
        # blocking too; fall back to plain XLA for that pathological case.
        p = jax.nn.sigmoid(x)
        loss = (-jnp.power(1.0 - p, gamma) * t * jnp.log(p + eps)
                - jnp.power(p, gamma) * (1.0 - t) * jnp.log(1.0 - p + eps))
        return jnp.sum(loss), n

    x2 = x.reshape(n_rows, wl)
    t2 = t.reshape(n_rows, wl)

    max_rows = max(SUBLANES,
                   (TARGET_BLOCK_BYTES // (lpad * 4)) // SUBLANES * SUBLANES)
    if n_rows < 2 * SUBLANES:
        ncores, row_tile, steps, nblocks = 1, n_rows, 1, 1
    else:
        # 2 shards: megacore parallel on v7x, a cheap 2-iteration loop elsewhere.
        ncores = 2
        steps0 = _cdiv(_round_up(_cdiv(n_rows, ncores), SUBLANES), max_rows)
        row_tile = min(max_rows,
                       _round_up(_cdiv(n_rows, ncores * steps0), SUBLANES))
        nblocks = _cdiv(n_rows, row_tile)   # total row padding < one block
        steps = _cdiv(nblocks, ncores)

    in_spec = pl.BlockSpec(
        (row_tile, wl),
        lambda c, i: (jnp.minimum(c * steps + i, nblocks - 1), 0))

    partial = pl.pallas_call(
        _make_focal_kernel(gamma, eps, n_rows, row_tile, steps, nblocks),
        out_shape=jax.ShapeDtypeStruct((1, ncores * lpad), jnp.float32),
        grid_spec=pltpu.PrefetchScalarGridSpec(
            num_scalar_prefetch=0,
            grid=(ncores, steps),
            in_specs=[in_spec, in_spec],
            out_specs=pl.BlockSpec((1, lpad), lambda c, i: (0, c)),
        ),
        compiler_params=pltpu.CompilerParams(
            dimension_semantics=("parallel", "arbitrary")),
    )(x2, t2)

    return jnp.sum(partial), n


@functools.partial(jax.jit, static_argnames=("gamma", "eps", "reduction"))
def focal_loss(input, target, gamma=0.0, eps=1e-8, reduction="mean"):
    """Pallas equivalent of FocalLoss(gamma, reduction)(input, target)."""
    total, n = _focal_loss_sum(input, target, float(gamma), float(eps))
    if reduction == "sum":
        return total
    if reduction == "mean":
        # torch.mean runs after squeeze(dim=1), which does not change the count.
        return total / jnp.float32(n)
    # TODO(synk): reduction='none' needs a per-element (elementwise-output)
    # kernel; only 'mean' and 'sum' are wired up.
    raise NotImplementedError("reduction='none' not implemented")


class FocalLoss:
    """Mirror of the PyTorch module (alpha is stored but unused, as in the spec)."""

    def __init__(self, gamma=0, alpha=None, reduction="mean"):
        self.gamma = gamma
        self.alpha = 0 if alpha is None else alpha
        self.eps = 1e-8
        self.reduction = reduction

    def __call__(self, input, target):
        return focal_loss(input, target, gamma=float(self.gamma),
                          eps=self.eps, reduction=self.reduction)


def focal_loss_ref(x, target, gamma, eps=1e-8, reduction="mean"):
    """Pure-JAX transcription of the PyTorch forward (for verification)."""
    p = jax.nn.sigmoid(x.astype(jnp.float32))
    t = target.astype(jnp.float32)
    loss = (-jnp.power(1.0 - p, gamma) * t * jnp.log(p + eps)
            - jnp.power(p, gamma) * (1.0 - t) * jnp.log(1.0 - p + eps))
    loss = jnp.squeeze(loss, axis=1)
    if reduction == "mean":
        return jnp.mean(loss)
    if reduction == "sum":
        return jnp.sum(loss)
    return loss


if __name__ == "__main__":
    key = jax.random.PRNGKey(0)
    ks = jax.random.split(key, 6)

    # (N, C=1, H, W), matching the module's squeeze(dim=1) use-case.
    x1 = jax.random.normal(ks[0], (2, 1, 16, 16), dtype=jnp.float32)
    t1 = (jax.random.uniform(ks[1], (2, 1, 16, 16)) > 0.5).astype(jnp.float32)

    # 128-aligned element count, 2-shard grid with a masked trailing row block.
    x2 = jax.random.normal(ks[2], (2, 1, 36, 64), dtype=jnp.float32)
    t2 = (jax.random.uniform(ks[3], (2, 1, 36, 64)) > 0.5).astype(jnp.float32)

    # Unaligned element count -> (rows, W=351) lane layout, partial last block.
    x3 = jax.random.normal(ks[4], (2, 1, 100, 351), dtype=jnp.float32)
    t3 = (jax.random.uniform(ks[5], (2, 1, 100, 351)) > 0.5).astype(jnp.float32)

    cases = [
        (x1, t1, 2.0, "mean"),   # integer gamma, single tiny block
        (x1, t1, 1.5, "mean"),   # non-integer gamma path
        (x2, t2, 2.0, "mean"),   # aligned, 2 shards, masked tail block
        (x3, t3, 0.0, "mean"),   # module-default gamma, unaligned lane layout
        (x3, t3, 2.0, "sum"),    # sum reduction
    ]
    for xx, tt, g, red in cases:
        got = jax.block_until_ready(FocalLoss(gamma=g, reduction=red)(xx, tt))
        want = focal_loss_ref(xx, tt, gamma=g, reduction=red)
        assert jnp.allclose(got, want, rtol=1e-4, atol=1e-6), (g, red, got, want)

    print("KERNEL_OK")
</pallas_src>

<mosaic_0001>
module attributes {stable_mosaic.version = 11 : i64} {
  func.func @kernel(%arg0: i32, %arg1: i32, %arg2: memref<4x128xf32, #tpu.memory_space<vmem>>, %arg3: memref<4x128xf32, #tpu.memory_space<vmem>>, %arg4: memref<1x128xf32, #tpu.memory_space<vmem>>) attributes {dimension_semantics = [#tpu.dimension_semantics<parallel>, #tpu.dimension_semantics<arbitrary>], iteration_bounds = array<i64: 1, 1>, scalar_prefetch = 0 : i64, scratch_operands = 0 : i64, tpu.core_type = #tpu.core_type<tc>, window_params = [{transform_indices = @transform_0, window_bounds = array<i64: 4, 128>}, {transform_indices = @transform_1, window_bounds = array<i64: 4, 128>}, {transform_indices = @transform_2, window_bounds = array<i64: 1, 128>}]} {
    %c0_i32 = arith.constant 0 : i32
    %0 = arith.cmpi eq, %arg1, %c0_i32 : i32
    %1 = arith.extui %0 : i1 to i32
    %c0_i32_0 = arith.constant 0 : i32
    %2 = arith.cmpi ne, %1, %c0_i32_0 : i32
    scf.if %2 {
      %cst_19 = arith.constant 0.000000e+00 : f32
      %47 = vector.broadcast %cst_19 : f32 to vector<1x128xf32>
      %c0_20 = arith.constant 0 : index
      %c0_21 = arith.constant 0 : index
      %48 = vector.load %arg4[%c0_20, %c0_21] : memref<1x128xf32, #tpu.memory_space<vmem>>, vector<1x128xf32>
      tpu.vector_store %arg4[%c0_20, %c0_21], %47 {strides = array<i32>} : memref<1x128xf32, #tpu.memory_space<vmem>>, vector<1x128xf32>,
    } else {
    }
    %c0 = arith.constant 0 : index
    %c0_1 = arith.constant 0 : index
    %3 = vector.load %arg2[%c0, %c0_1] : memref<4x128xf32, #tpu.memory_space<vmem>>, vector<4x128xf32>
    %c0_2 = arith.constant 0 : index
    %c0_3 = arith.constant 0 : index
    %4 = vector.load %arg3[%c0_2, %c0_3] : memref<4x128xf32, #tpu.memory_space<vmem>>, vector<4x128xf32>
    %cst = arith.constant 5.000000e-01 : f32
    %5 = vector.broadcast %cst : f32 to vector<4x128xf32>
    %6 = arith.mulf %5, %3 : vector<4x128xf32>
    %7 = math.tanh %6 : vector<4x128xf32>
    %cst_4 = arith.constant 5.000000e-01 : f32
    %8 = vector.broadcast %cst_4 : f32 to vector<4x128xf32>
    %9 = arith.mulf %8, %7 : vector<4x128xf32>
    %cst_5 = arith.constant 5.000000e-01 : f32
    %10 = vector.broadcast %cst_5 : f32 to vector<4x128xf32>
    %11 = arith.addf %9, %10 : vector<4x128xf32>
    %cst_6 = arith.constant 9.99999993E-9 : f32
    %12 = vector.broadcast %cst_6 : f32 to vector<4x128xf32>
    %13 = arith.addf %11, %12 : vector<4x128xf32>
    %14 = math.log %13 : vector<4x128xf32>
    %15 = arith.subf %14, %3 : vector<4x128xf32>
    %cst_7 = arith.constant -18.420681 : f32
    %cst_8 = arith.constant 0.000000e+00 : f32
    %16 = vector.broadcast %cst_7 : f32 to vector<4x128xf32>
    %17 = arith.maximumf %16, %15 : vector<4x128xf32>
    %18 = vector.broadcast %cst_8 : f32 to vector<4x128xf32>
    %19 = arith.minimumf %18, %17 : vector<4x128xf32>
    %cst_9 = arith.constant 1.000000e+00 : f32
    %20 = vector.broadcast %cst_9 : f32 to vector<4x128xf32>
    %21 = arith.subf %20, %11 : vector<4x128xf32>
    %22 = arith.mulf %21, %21 : vector<4x128xf32>
    %23 = arith.mulf %11, %11 : vector<4x128xf32>
    %24 = arith.mulf %22, %4 : vector<4x128xf32>
    %25 = arith.mulf %24, %14 : vector<4x128xf32>
    %cst_10 = arith.constant 0.000000e+00 : f32
    %26 = vector.broadcast %cst_10 : f32 to vector<4x128xf32>
    %27 = arith.subf %26, %25 : vector<4x128xf32>
    %cst_11 = arith.constant 1.000000e+00 : f32
    %28 = vector.broadcast %cst_11 : f32 to vector<4x128xf32>
    %29 = arith.subf %28, %4 : vector<4x128xf32>
    %30 = arith.mulf %23, %29 : vector<4x128xf32>
    %31 = arith.mulf %30, %19 : vector<4x128xf32>
    %32 = arith.subf %27, %31 : vector<4x128xf32>
    %c1_i32 = arith.constant 1 : i32
    %33 = arith.muli %arg0, %c1_i32 : i32
    %34 = arith.addi %33, %arg1 : i32
    %c0_i32_12 = arith.constant 0 : i32
    %35 = arith.minsi %34, %c0_i32_12 : i32
    %c1_i32_13 = arith.constant 1 : i32
    %36 = arith.cmpi slt, %34, %c1_i32_13 : i32
    %c4_i32 = arith.constant 4 : i32
    %37 = arith.muli %35, %c4_i32 : i32
    %c4_i32_14 = arith.constant 4 : i32
    %38 = arith.subi %c4_i32_14, %37 : i32
    %c4_i32_15 = arith.constant 4 : i32
    %39 = arith.cmpi sge, %38, %c4_i32_15 : i32
    %40 = arith.andi %36, %39 : i1
    %41 = arith.extui %40 : i1 to i32
    %c0_i32_16 = arith.constant 0 : i32
    %42 = arith.cmpi ne, %41, %c0_i32_16 : i32
    scf.if %42 {
      %c0_19 = arith.constant 0 : index
      %c0_20 = arith.constant 0 : index
      %47 = vector.load %arg4[%c0_19, %c0_20] : memref<1x128xf32, #tpu.memory_space<vmem>>, vector<1x128xf32>
      %cst_21 = arith.constant dense<0.000000e+00> : vector<128xf32>
      %48 = vector.multi_reduction <add>, %32, %cst_21 [0] : vector<4x128xf32> to vector<128xf32>
      %49 = vector.shape_cast %48 : vector<128xf32> to vector<1x128xf32>
      %50 = arith.addf %47, %49 : vector<1x128xf32>
      %c0_22 = arith.constant 0 : index
      %c0_23 = arith.constant 0 : index
      %51 = vector.load %arg4[%c0_22, %c0_23] : memref<1x128xf32, #tpu.memory_space<vmem>>, vector<1x128xf32>
      tpu.vector_store %arg4[%c0_22, %c0_23], %50 {strides = array<i32>} : memref<1x128xf32, #tpu.memory_space<vmem>>, vector<1x128xf32>,
    } else {
    }
    %c4_i32_17 = arith.constant 4 : i32
    %43 = arith.cmpi slt, %38, %c4_i32_17 : i32
    %44 = arith.andi %36, %43 : i1
    %45 = arith.extui %44 : i1 to i32
    %c0_i32_18 = arith.constant 0 : i32
    %46 = arith.cmpi ne, %45, %c0_i32_18 : i32
    scf.if %46 {
      %47 = tpu.iota {dimensions = array<i32: 0>} : vector<4x128xi32>
      %48 = vector.broadcast %38 : i32 to vector<4x128xi32>
      %49 = arith.cmpi slt, %47, %48 : vector<4x128xi32>
      %cst_19 = arith.constant 0.000000e+00 : f32
      %50 = vector.broadcast %cst_19 : f32 to vector<4x128xf32>
      %51 = arith.select %49, %32, %50 : vector<4x128xi1>, vector<4x128xf32>
      %c0_20 = arith.constant 0 : index
      %c0_21 = arith.constant 0 : index
      %52 = vector.load %arg4[%c0_20, %c0_21] : memref<1x128xf32, #tpu.memory_space<vmem>>, vector<1x128xf32>
      %cst_22 = arith.constant dense<0.000000e+00> : vector<128xf32>
      %53 = vector.multi_reduction <add>, %51, %cst_22 [0] : vector<4x128xf32> to vector<128xf32>
      %54 = vector.shape_cast %53 : vector<128xf32> to vector<1x128xf32>
      %55 = arith.addf %52, %54 : vector<1x128xf32>
      %c0_23 = arith.constant 0 : index
      %c0_24 = arith.constant 0 : index
      %56 = vector.load %arg4[%c0_23, %c0_24] : memref<1x128xf32, #tpu.memory_space<vmem>>, vector<1x128xf32>
      tpu.vector_store %arg4[%c0_23, %c0_24], %55 {strides = array<i32>} : memref<1x128xf32, #tpu.memory_space<vmem>>, vector<1x128xf32>,
    } else {
    }
    return
  }
  func.func @transform_0(%arg0: i32, %arg1: i32) -> (i32, i32) {
    %c1_i32 = arith.constant 1 : i32
    %0 = arith.muli %arg0, %c1_i32 : i32
    %1 = arith.addi %0, %arg1 : i32
    %c0_i32 = arith.constant 0 : i32
    %2 = arith.minsi %1, %c0_i32 : i32
    %c0_i32_0 = arith.constant 0 : i32
    %c0_i32_1 = arith.constant 0 : i32
    return %2, %c0_i32_0 : i32, i32
  }
  func.func @transform_1(%arg0: i32, %arg1: i32) -> (i32, i32) {
    %c1_i32 = arith.constant 1 : i32
    %0 = arith.muli %arg0, %c1_i32 : i32
    %1 = arith.addi %0, %arg1 : i32
    %c0_i32 = arith.constant 0 : i32
    %2 = arith.minsi %1, %c0_i32 : i32
    %c0_i32_0 = arith.constant 0 : i32
    %c0_i32_1 = arith.constant 0 : i32
    return %2, %c0_i32_0 : i32, i32
  }
  func.func @transform_2(%arg0: i32, %arg1: i32) -> (i32, i32) {
    %c0_i32 = arith.constant 0 : i32
    %c0_i32_0 = arith.constant 0 : i32
    return %c0_i32, %arg0 : i32, i32
  }
}

</mosaic_0001>

<llo_original>
// kernel: focal_loss.1
$region0: #{focal_loss.1}
  #allocation0 [shape = 'u32[]', space=smem, size = 0x4, offset = 0x4, fixed_abs, tag = 'smem constant byte address 0x4 - core index']
  #allocation1 [shape = 'u32[144,128]{1,0:T(1,128)}', space=vmem, size = 0x12000, scoped, tag = 'internal scratch']
  %s0 = inlined_call_operand.vmem [shape: f32[4,128], index: 0, kind: input, shape index: {}]
  %s1 = inlined_call_operand.vmem [shape: f32[4,128], index: 1, kind: input, shape index: {}]
  %s2 = inlined_call_operand.vmem [shape: f32[1,128], index: 2, kind: output, shape index: {}]
  %s3 = sld [smem:[#allocation0]]
  $region30: #{focal_loss.1} parent=0
    _
  %s5 = ssub.s32 1, %s3
  %s6 = scalar_select 0, %s5, %s3
  // Predicated region
  $region2: #{focal_loss.1} parent=0 // pred_check
    _
  $region3: #{focal_loss.1} parent=0 // pred_check_branch
    %8 = sbr.rel (0) target = $region5
  $region4: #{focal_loss.1} parent=0 // pred_region
    %s9 = sadd.s32 0, 0
    %p10 = scmp.lt.s32.totalorder %s9, 0
    %s11 = scalar_select %p10, %s9, 0
    %p12 = scmp.lt.s32.totalorder %s11, 0
    %s13 = scalar_select %p12, %s11, 0
    %s14 = smul.addr %s13, 4
    %s15 = scalar_lea.vmem %s0, %s14
    %s16 = sadd.s32 0, 0
    %p17 = scmp.lt.s32.totalorder %s16, 0
    %s18 = scalar_select %p17, %s16, 0
  $region5: #{focal_loss.1} parent=0 // pred_fallthru
    _
  // Predicated region
  $region6: #{focal_loss.1} parent=0 // pred_check
    _
  $region7: #{focal_loss.1} parent=0 // pred_check_branch
    %20 = sbr.rel (0) target = $region9
  $region8: #{focal_loss.1} parent=0 // pred_region
    %s21 = sadd.s32 0, 0
    %p22 = scmp.lt.s32.totalorder %s21, 0
    %s23 = scalar_select %p22, %s21, 0
    %p24 = scmp.lt.s32.totalorder %s23, 0
    %s25 = scalar_select %p24, %s23, 0
    %s26 = smul.addr %s25, 4
    %s27 = scalar_lea.vmem %s1, %s26
    %s28 = sadd.s32 0, 0
    %p29 = scmp.lt.s32.totalorder %s28, 0
    %s30 = scalar_select %p29, %s28, 0
  $region9: #{focal_loss.1} parent=0 // pred_fallthru
    _
  %s31 = sadd.s32 0, 0
  %p32 = scmp.lt.s32.totalorder %s31, 0
  %s33 = scalar_select %p32, %s31, 0
  %p34 = scmp.lt.s32.totalorder %s33, 0
  %s35 = scalar_select %p34, %s33, 0
  %s36 = smul.addr %s35, 4
  %s37 = scalar_lea.vmem %s0, %s36
  %s38 = sadd.s32 0, 0
  %p39 = scmp.lt.s32.totalorder %s38, 0
  %s40 = scalar_select %p39, %s38, 0
  %p41 = scmp.lt.s32.totalorder %s40, 0
  %s42 = scalar_select %p41, %s40, 0
  %s43 = smul.addr %s42, 4
  %s44 = scalar_lea.vmem %s1, %s43
  %s45 = sadd.s32 0, 0
  %p46 = scmp.lt.s32.totalorder %s45, 0
  %s47 = scalar_select %p46, %s45, 0
  %p48 = scmp.lt.s32.totalorder %s47, 0
  %s49 = scalar_select %p48, %s47, 0
  %s50 = smul.addr %s49, 4
  %s51 = scalar_lea.vmem %s0, %s50
  %s52 = sadd.s32 0, 0
  %p53 = scmp.lt.s32.totalorder %s52, 0
  %s54 = scalar_select %p53, %s52, 0
  %s55 = sadd.s32 0, 0
  %p56 = scmp.lt.s32.totalorder %s55, 0
  %s57 = scalar_select %p56, %s55, 0
  %p58 = scmp.lt.s32.totalorder %s57, 0
  %s59 = scalar_select %p58, %s57, 0
  %s60 = smul.addr %s59, 4
  %s61 = scalar_lea.vmem %s1, %s60
  %s62 = sadd.s32 0, 0
  %p63 = scmp.lt.s32.totalorder %s62, 0
  %s64 = scalar_select %p63, %s62, 0
  %p65 = scmp.eq.s32.totalorder 0, 0
  // Predicated region
  $region10: #{focal_loss.1} parent=0 // pred_check
    %p66 = pneg %p65
  $region11: #{focal_loss.1} parent=0 // pred_check_branch
    %68 = sbr.rel (%p66) target = $region13
  $region12: #{focal_loss.1} parent=0 // pred_region
    %69 = vst [vmem:[%s2] sm:$0x1] 0.0
  $region13: #{focal_loss.1} parent=0 // pred_fallthru
    _
  %v70 = vld [vmem:[%s51] sm:$0xf]
  %v71 = vld [vmem:[%s61] sm:$0xf]
  %v72 = vmul.f32 %v70, 0.5
  %v73 = vtanh.pop %v72
  %v74 = vmul.f32 %v73, 0.5
  %v75 = vadd.f32 %v74, 0.5
  %v76 = vadd.f32 %v75, 1e-08
  %v77 = vlog2.pop %v76
  %v78 = vmul.f32 %v77, 0.6931472
  %v79 = vsub.f32 %v78, %v70
  %v80 = vmax.f32 %v79, -18.420681
  %v81 = vmin.f32 %v80, 0.0
  %v82 = vsub.f32 1.0, %v75
  %v83 = vmul.f32 %v82, %v82
  %v84 = vmul.f32 %v75, %v75
  %v85 = vmul.f32 %v83, %v71
  %v86 = vmul.f32 %v85, %v78
  %v87 = vsub.f32 0.0, %v86
  %v88 = vsub.f32 1.0, %v71
  %v89 = vmul.f32 %v84, %v88
  %v90 = vmul.f32 %v89, %v81
  %v91 = vsub.f32 %v87, %v90
  %s92 = sadd.s32 0, 0
  %p93 = scmp.lt.s32.totalorder %s92, 0
  %s94 = scalar_select %p93, %s92, 0
  %p95 = scmp.lt.s32.totalorder %s92, 1
  %s96 = smul.u32 %s94, 4
  %s97 = ssub.s32 4, %s96
  %p98 = scmp.ge.s32.totalorder %s97, 4
  %p99 = pnand %p95, %p98
  %p100 = pneg %p99
  // Predicated region
  $region14: #{focal_loss.1} parent=0 // pred_check
    _
  $region15: #{focal_loss.1} parent=0 // pred_check_branch
    %102 = sbr.rel (%p99) target = $region17
  $region16: #{focal_loss.1} parent=0 // pred_region
    %v103 = vld [vmem:[%s2] sm:$0x1]
    %vm104 = vcmask 1043456
    %v105 = vsel %vm104, %v91, 0.0
    %v106 = vrot.slane %v105, 4
    %v107 = vadd.f32 %v105, %v106
    %v108 = vrot.slane %v107, 2
    %v109 = vadd.f32 %v107, %v108
    %v110 = vrot.slane %v109, 1
    %v111 = vadd.f32 %v109, %v110
    %v112 = vadd.f32 %v103, %v111
    %113 = vst [vmem:[%s2] sm:$0x1] %v112
  $region17: #{focal_loss.1} parent=0 // pred_fallthru
    _
  %p114 = scmp.lt.s32.totalorder %s97, 4
  %p115 = pnand %p95, %p114
  %p116 = pneg %p115
  // Predicated region
  $region18: #{focal_loss.1} parent=0 // pred_check
    _
  $region19: #{focal_loss.1} parent=0 // pred_check_branch
    %118 = sbr.rel (%p115) target = $region21
  $region20: #{focal_loss.1} parent=0 // pred_region
    %v119 = vlaneseq
    %v120 = vshrl.u32 %v119, 7
    %v121 = vstv %s97
    %vm122 = vcmp.lt.s32.totalorder %v120, %v121
    %v123 = vsel %vm122, %v91, 0.0
    %v124 = vld [vmem:[%s2] sm:$0x1]
    %vm125 = vcmask 1043456
    %v126 = vsel %vm125, %v123, 0.0
    %v127 = vrot.slane %v126, 4
    %v128 = vadd.f32 %v126, %v127
    %v129 = vrot.slane %v128, 2
    %v130 = vadd.f32 %v128, %v129
    %v131 = vrot.slane %v130, 1
    %v132 = vadd.f32 %v130, %v131
    %v133 = vadd.f32 %v124, %v132
    %134 = vst [vmem:[%s2] sm:$0x1] %v133
  $region21: #{focal_loss.1} parent=0 // pred_fallthru
    _
  // Predicated region
  $region22: #{focal_loss.1} parent=0 // pred_check
    _
  $region23: #{focal_loss.1} parent=0 // pred_check_branch
    %136 = sbr.rel (0) target = $region25
  $region24: #{focal_loss.1} parent=0 // pred_region
    _
  $region25: #{focal_loss.1} parent=0 // pred_fallthru
    _
  // Predicated region
  $region26: #{focal_loss.1} parent=0 // pred_check
    _
  $region27: #{focal_loss.1} parent=0 // pred_check_branch
    %138 = sbr.rel (0) target = $region29
  $region28: #{focal_loss.1} parent=0 // pred_region
    _
  $region29: #{focal_loss.1} parent=0 // pred_fallthru
    _

</llo_original>
